<compile_context>
chip_gen: v5e
topology: v5e:2x2
jax: 0.10.0
libtpu: 0.0.40
codegen_flags: <defaults>
</compile_context>

<pallas_src>
import jax
import jax.numpy as jnp
import numpy as np
from jax.experimental import pallas as pl
from jax.experimental.pallas import tpu as pltpu


def _round_up(x, m):
    return ((x + m - 1) // m) * m


def _pick_tr(n_pairs, bytes_per_pair, budget_bytes):
    """Largest divisor of n_pairs whose block fits the VMEM budget; prefer >=2 grid steps."""
    tr_max = max(1, budget_bytes // max(1, bytes_per_pair))
    divisors = [d for d in range(1, n_pairs + 1) if n_pairs % d == 0]
    fitting = [d for d in divisors if d <= tr_max]
    if not fitting:
        return 1
    tr = max(fitting)
    if tr == n_pairs and n_pairs > 1:
        smaller = [d for d in fitting if d < n_pairs]
        if smaller:
            tr = max(smaller)  # >= 2 grid steps: pipelining + v7x dual-TC balance
    return tr


def trans_layer_kernel(x_ref, scale_ref, shift_ref, w_ref, b_ref, o_ref, rs_ref):
    # x_ref:     (TR, 2*W, Cp)  TR row-pairs; cols [0:W) = even image row, [W:2W) = odd row
    # scale_ref: (1, Cp)  folded BN scale = gamma / sqrt(var + eps)         (f32)
    # shift_ref: (1, Cp)  folded BN shift = beta - mean * scale             (f32)
    # w_ref:     (Cp, Kp) 1x1 conv weight (transposed, channel-padded)
    # b_ref:     (1, Kp)  conv bias                                         (f32)
    # o_ref:     (TR, Wo, Kp) pooled output
    # rs_ref:    (TR*W, Kp) f32 VMEM scratch holding the row-summed conv output
    TR = x_ref.shape[0]
    W = x_ref.shape[1] // 2
    Cp = x_ref.shape[2]
    Wo = o_ref.shape[1]
    Kp = o_ref.shape[2]

    scale = scale_ref[...]
    shift = shift_ref[...]
    w = w_ref[...]
    b = b_ref[...]

    def bn_relu_conv(xs):
        # xs: (TR, W, Cp) -> relu(conv1x1(relu(BN(x)))): (TR*W, Kp) f32
        xf = xs.reshape(TR * W, Cp).astype(jnp.float32)
        xn = jnp.maximum(xf * scale + shift, 0.0)
        y = jnp.dot(xn.astype(w.dtype), w, preferred_element_type=jnp.float32)
        return jnp.maximum(y + b, 0.0)

    y_even = bn_relu_conv(x_ref[:, :W, :])   # even image rows of each pair
    y_odd = bn_relu_conv(x_ref[:, W:, :])    # odd image rows of each pair

    # 2x2 average pool: rows summed elementwise; columns summed via stride-2 reads.
    rs_ref[...] = y_even + y_odd                          # (TR*W, Kp), row order (pair, col)
    ev = rs_ref[pl.ds(0, TR * Wo, stride=2), :]           # even columns
    od = rs_ref[pl.ds(1, TR * Wo, stride=2), :]           # odd columns
    pooled = (ev + od) * 0.25                             # (TR*Wo, Kp)
    o_ref[...] = pooled.reshape(TR, Wo, Kp).astype(o_ref.dtype)


def trans_layer(x_nchw, params, eps=1e-5, conv_dtype=jnp.float32,
                vmem_block_budget=10 * 1024 * 1024):
    """Forward pass of Trans_layer. x_nchw: (N, Cin, H, W) float32 -> (N, Cout, H//2, W//2)."""
    N, Cin, H, W = x_nchw.shape
    gamma, beta = params["gamma"], params["beta"]
    w_oihw, bias = params["w"], params["b"]
    Cout = w_oihw.shape[0]

    # PyTorch AvgPool2d(2, 2) drops a trailing odd row/column.
    He, We = (H // 2) * 2, (W // 2) * 2
    assert He >= 2 and We >= 2, "spatial dims must be >= 2 for a 2x2 avg-pool"
    Ho, Wo = He // 2, We // 2

    # Train-mode BatchNorm statistics (biased variance) over the full input, folded
    # into a per-channel scale/shift applied in-kernel.
    mean = jnp.mean(x_nchw, axis=(0, 2, 3))
    var = jnp.var(x_nchw, axis=(0, 2, 3))
    scale = gamma / jnp.sqrt(var + eps)
    shift = beta - mean * scale

    # Pad channels to lane-dense multiples of 128 (no-op for real DenseNet widths).
    Cp = _round_up(Cin, 128)
    Kp = _round_up(Cout, 128)

    # NCHW -> NHWC, crop to even spatial dims, pad channels, fold image rows into
    # row-pairs: (N*Ho, 2*We, Cp); row r holds [image-row 2r | image-row 2r+1].
    # TODO(synk): fuse this transpose + the BN-stats reduction into a Pallas pre-pass to
    # cut the extra HBM read/write of x (the op is memory-bound end to end).
    x = jnp.transpose(x_nchw, (0, 2, 3, 1))[:, :He, :We, :]
    if Cp != Cin:
        x = jnp.pad(x, ((0, 0), (0, 0), (0, 0), (0, Cp - Cin)))
    x = x.reshape(N * Ho, 2 * We, Cp).astype(conv_dtype)

    scale_p = jnp.pad(scale, (0, Cp - Cin)).reshape(1, Cp).astype(jnp.float32)
    shift_p = jnp.pad(shift, (0, Cp - Cin)).reshape(1, Cp).astype(jnp.float32)
    w2d = jnp.transpose(w_oihw.reshape(Cout, Cin), (1, 0))                 # (Cin, Cout)
    w_p = jnp.pad(w2d, ((0, Cp - Cin), (0, Kp - Cout))).astype(conv_dtype)  # (Cp, Kp)
    b_p = jnp.pad(bias, (0, Kp - Cout)).reshape(1, Kp).astype(jnp.float32)

    # Grid coarsening: TR row-pairs per grid step, sized against a VMEM budget
    # (double-buffered input + output blocks + the row-sum scratch).
    x_bytes = jnp.dtype(conv_dtype).itemsize
    bytes_per_pair = (2 * (2 * We * Cp * x_bytes)   # input block, double-buffered
                      + 2 * (Wo * Kp * 4)           # output block, double-buffered
                      + We * Kp * 4)                # row-sum scratch
    n_pairs = N * Ho
    TR = _pick_tr(n_pairs, bytes_per_pair, vmem_block_budget)

    out = pl.pallas_call(
        trans_layer_kernel,
        out_shape=jax.ShapeDtypeStruct((n_pairs, Wo, Kp), jnp.float32),
        grid=(n_pairs // TR,),
        in_specs=[
            pl.BlockSpec((TR, 2 * We, Cp), lambda i: (i, 0, 0)),
            pl.BlockSpec((1, Cp), lambda i: (0, 0)),
            pl.BlockSpec((1, Cp), lambda i: (0, 0)),
            pl.BlockSpec((Cp, Kp), lambda i: (0, 0)),
            pl.BlockSpec((1, Kp), lambda i: (0, 0)),
        ],
        out_specs=pl.BlockSpec((TR, Wo, Kp), lambda i: (i, 0, 0)),
        scratch_shapes=[pltpu.VMEM((TR * We, Kp), jnp.float32)],
        compiler_params=pltpu.CompilerParams(
            dimension_semantics=("parallel",),
            vmem_limit_bytes=32 * 1024 * 1024,
        ),
    )(x, scale_p, shift_p, w_p, b_p)

    # (N*Ho, Wo, Kp) -> strip channel padding -> NCHW
    out = out[:, :, :Cout].reshape(N, Ho, Wo, Cout)
    return jnp.transpose(out, (0, 3, 1, 2))


def init_params(key, in_channels, out_channels):
    k1, k2, k3, k4 = jax.random.split(key, 4)
    return dict(
        gamma=1.0 + 0.1 * jax.random.normal(k1, (in_channels,), jnp.float32),
        beta=0.1 * jax.random.normal(k2, (in_channels,), jnp.float32),
        w=0.1 * jax.random.normal(k3, (out_channels, in_channels, 1, 1), jnp.float32),
        b=0.1 * jax.random.normal(k4, (out_channels,), jnp.float32),
    )


def reference(x, params, eps=1e-5):
    """Pure-JAX reference matching the PyTorch forward (train-mode BN, 1x1 conv, 2x2 avg-pool)."""
    mean = x.mean(axis=(0, 2, 3), keepdims=True)
    var = x.var(axis=(0, 2, 3), keepdims=True)
    g = params["gamma"].reshape(1, -1, 1, 1)
    b = params["beta"].reshape(1, -1, 1, 1)
    xn = jnp.maximum(g * (x - mean) / jnp.sqrt(var + eps) + b, 0.0)
    y = jax.lax.conv_general_dilated(xn, params["w"], (1, 1), "VALID")
    y = jnp.maximum(y + params["b"].reshape(1, -1, 1, 1), 0.0)
    N, C, H, W = y.shape
    return y.reshape(N, C, H // 2, 2, W // 2, 2).mean(axis=(3, 5))


if __name__ == "__main__":
    key = jax.random.PRNGKey(0)
    kx, kp = jax.random.split(key)

    N, Cin, Cout, H, W = 2, 4, 8, 16, 16
    x = jax.random.normal(kx, (N, Cin, H, W), jnp.float32)
    params = init_params(kp, Cin, Cout)

    ref = jax.block_until_ready(reference(x, params))

    # float32 conv path (default): strict check.
    out = jax.block_until_ready(trans_layer(x, params))
    assert out.shape == (N, Cout, H // 2, W // 2), out.shape
    np.testing.assert_allclose(np.asarray(out), np.asarray(ref), rtol=1e-5, atol=1e-5)

    # bfloat16 conv path (v6e/v7x perf option): looser tolerance.
    out_bf16 = jax.block_until_ready(trans_layer(x, params, conv_dtype=jnp.bfloat16))
    np.testing.assert_allclose(np.asarray(out_bf16), np.asarray(ref), rtol=5e-2, atol=5e-2)

    print("KERNEL_OK")
</pallas_src>

<mosaic_0001>
module attributes {stable_mosaic.version = 11 : i64} {
  func.func @trans_layer_kernel(%arg0: i32, %arg1: memref<8x32x128xf32, #tpu.memory_space<vmem>>, %arg2: memref<1x128xf32, #tpu.memory_space<vmem>>, %arg3: memref<1x128xf32, #tpu.memory_space<vmem>>, %arg4: memref<128x128xf32, #tpu.memory_space<vmem>>, %arg5: memref<1x128xf32, #tpu.memory_space<vmem>>, %arg6: memref<8x8x128xf32, #tpu.memory_space<vmem>>, %arg7: memref<128x128xf32, #tpu.memory_space<vmem>>) attributes {dimension_semantics = [#tpu.dimension_semantics<parallel>], iteration_bounds = array<i64: 2>, scalar_prefetch = 0 : i64, scratch_operands = 1 : i64, tpu.core_type = #tpu.core_type<tc>, window_params = [{transform_indices = @transform_0, window_bounds = array<i64: 8, 32, 128>}, {pipeline_mode = #tpu.pipeline_mode<synchronous>, transform_indices = @transform_1, window_bounds = array<i64: 1, 128>}, {pipeline_mode = #tpu.pipeline_mode<synchronous>, transform_indices = @transform_2, window_bounds = array<i64: 1, 128>}, {pipeline_mode = #tpu.pipeline_mode<synchronous>, transform_indices = @transform_3, window_bounds = array<i64: 128, 128>}, {pipeline_mode = #tpu.pipeline_mode<synchronous>, transform_indices = @transform_4, window_bounds = array<i64: 1, 128>}, {transform_indices = @transform_5, window_bounds = array<i64: 8, 8, 128>}]} {
    %c0 = arith.constant 0 : index
    %c0_0 = arith.constant 0 : index
    %0 = vector.load %arg2[%c0, %c0_0] : memref<1x128xf32, #tpu.memory_space<vmem>>, vector<1x128xf32>
    %c0_1 = arith.constant 0 : index
    %c0_2 = arith.constant 0 : index
    %1 = vector.load %arg3[%c0_1, %c0_2] : memref<1x128xf32, #tpu.memory_space<vmem>>, vector<1x128xf32>
    %c0_3 = arith.constant 0 : index
    %c0_4 = arith.constant 0 : index
    %2 = vector.load %arg4[%c0_3, %c0_4] : memref<128x128xf32, #tpu.memory_space<vmem>>, vector<128x128xf32>
    %c0_5 = arith.constant 0 : index
    %c0_6 = arith.constant 0 : index
    %3 = vector.load %arg5[%c0_5, %c0_6] : memref<1x128xf32, #tpu.memory_space<vmem>>, vector<1x128xf32>
    %c0_7 = arith.constant 0 : index
    %c0_8 = arith.constant 0 : index
    %c0_9 = arith.constant 0 : index
    %4 = vector.load %arg1[%c0_7, %c0_8, %c0_9] : memref<8x32x128xf32, #tpu.memory_space<vmem>>, vector<8x16x128xf32>
    %5 = vector.shape_cast %4 : vector<8x16x128xf32> to vector<128x128xf32>
    %6 = vector.broadcast %0 : vector<1x128xf32> to vector<128x128xf32>
    %7 = arith.mulf %5, %6 : vector<128x128xf32>
    %8 = vector.broadcast %1 : vector<1x128xf32> to vector<128x128xf32>
    %9 = arith.addf %7, %8 : vector<128x128xf32>
    %cst = arith.constant 0.000000e+00 : f32
    %10 = vector.broadcast %cst : f32 to vector<128x128xf32>
    %11 = arith.maximumf %9, %10 : vector<128x128xf32>
    %cst_10 = arith.constant dense<0.000000e+00> : vector<128x128xf32>
    %12 = tpu.matmul %11, %2, %cst_10 {dimension_numbers = #tpu.dot_dimension_numbers<[1], [0], [0], [1], [0, 0, 1, 1], [], []>} : vector<128x128xf32>, vector<128x128xf32>, vector<128x128xf32> -> vector<128x128xf32>
    %13 = vector.broadcast %3 : vector<1x128xf32> to vector<128x128xf32>
    %14 = arith.addf %12, %13 : vector<128x128xf32>
    %cst_11 = arith.constant 0.000000e+00 : f32
    %15 = vector.broadcast %cst_11 : f32 to vector<128x128xf32>
    %16 = arith.maximumf %14, %15 : vector<128x128xf32>
    %c0_12 = arith.constant 0 : index
    %c16 = arith.constant 16 : index
    %c0_13 = arith.constant 0 : index
    %17 = vector.load %arg1[%c0_12, %c16, %c0_13] : memref<8x32x128xf32, #tpu.memory_space<vmem>>, vector<8x16x128xf32>
    %18 = vector.shape_cast %17 : vector<8x16x128xf32> to vector<128x128xf32>
    %19 = vector.broadcast %0 : vector<1x128xf32> to vector<128x128xf32>
    %20 = arith.mulf %18, %19 : vector<128x128xf32>
    %21 = vector.broadcast %1 : vector<1x128xf32> to vector<128x128xf32>
    %22 = arith.addf %20, %21 : vector<128x128xf32>
    %cst_14 = arith.constant 0.000000e+00 : f32
    %23 = vector.broadcast %cst_14 : f32 to vector<128x128xf32>
    %24 = arith.maximumf %22, %23 : vector<128x128xf32>
    %cst_15 = arith.constant dense<0.000000e+00> : vector<128x128xf32>
    %25 = tpu.matmul %24, %2, %cst_15 {dimension_numbers = #tpu.dot_dimension_numbers<[1], [0], [0], [1], [0, 0, 1, 1], [], []>} : vector<128x128xf32>, vector<128x128xf32>, vector<128x128xf32> -> vector<128x128xf32>
    %26 = vector.broadcast %3 : vector<1x128xf32> to vector<128x128xf32>
    %27 = arith.addf %25, %26 : vector<128x128xf32>
    %cst_16 = arith.constant 0.000000e+00 : f32
    %28 = vector.broadcast %cst_16 : f32 to vector<128x128xf32>
    %29 = arith.maximumf %27, %28 : vector<128x128xf32>
    %30 = arith.addf %16, %29 : vector<128x128xf32>
    %c0_17 = arith.constant 0 : index
    %c0_18 = arith.constant 0 : index
    %31 = vector.load %arg7[%c0_17, %c0_18] : memref<128x128xf32, #tpu.memory_space<vmem>>, vector<128x128xf32>
    tpu.vector_store %arg7[%c0_17, %c0_18], %30 {strides = array<i32>} : memref<128x128xf32, #tpu.memory_space<vmem>>, vector<128x128xf32>,
    %c0_19 = arith.constant 0 : index
    %c0_20 = arith.constant 0 : index
    %32 = tpu.strided_load %arg7[%c0_19, %c0_20] {strides = array<i32: 2, 1>} : memref<128x128xf32, #tpu.memory_space<vmem>>, vector<64x128xf32>
    %c1 = arith.constant 1 : index
    %c0_21 = arith.constant 0 : index
    %33 = tpu.strided_load %arg7[%c1, %c0_21] {strides = array<i32: 2, 1>} : memref<128x128xf32, #tpu.memory_space<vmem>>, vector<64x128xf32>
    %34 = arith.addf %32, %33 : vector<64x128xf32>
    %cst_22 = arith.constant 2.500000e-01 : f32
    %35 = vector.broadcast %cst_22 : f32 to vector<64x128xf32>
    %36 = arith.mulf %34, %35 : vector<64x128xf32>
    %37 = vector.shape_cast %36 : vector<64x128xf32> to vector<8x8x128xf32>
    %c0_23 = arith.constant 0 : index
    %c0_24 = arith.constant 0 : index
    %c0_25 = arith.constant 0 : index
    %38 = vector.load %arg6[%c0_23, %c0_24, %c0_25] : memref<8x8x128xf32, #tpu.memory_space<vmem>>, vector<8x8x128xf32>
    tpu.vector_store %arg6[%c0_23, %c0_24, %c0_25], %37 {strides = array<i32>} : memref<8x8x128xf32, #tpu.memory_space<vmem>>, vector<8x8x128xf32>,
    return
  }
  func.func @transform_0(%arg0: i32) -> (i32, i32, i32) {
    %c0_i32 = arith.constant 0 : i32
    %c0_i32_0 = arith.constant 0 : i32
    %c0_i32_1 = arith.constant 0 : i32
    return %arg0, %c0_i32, %c0_i32_0 : i32, i32, i32
  }
  func.func @transform_1(%arg0: i32) -> (i32, i32) {
    %c0_i32 = arith.constant 0 : i32
    %c0_i32_0 = arith.constant 0 : i32
    %c0_i32_1 = arith.constant 0 : i32
    return %c0_i32, %c0_i32_0 : i32, i32
  }
  func.func @transform_2(%arg0: i32) -> (i32, i32) {
    %c0_i32 = arith.constant 0 : i32
    %c0_i32_0 = arith.constant 0 : i32
    %c0_i32_1 = arith.constant 0 : i32
    return %c0_i32, %c0_i32_0 : i32, i32
  }
  func.func @transform_3(%arg0: i32) -> (i32, i32) {
    %c0_i32 = arith.constant 0 : i32
    %c0_i32_0 = arith.constant 0 : i32
    %c0_i32_1 = arith.constant 0 : i32
    return %c0_i32, %c0_i32_0 : i32, i32
  }
  func.func @transform_4(%arg0: i32) -> (i32, i32) {
    %c0_i32 = arith.constant 0 : i32
    %c0_i32_0 = arith.constant 0 : i32
    %c0_i32_1 = arith.constant 0 : i32
    return %c0_i32, %c0_i32_0 : i32, i32
  }
  func.func @transform_5(%arg0: i32) -> (i32, i32, i32) {
    %c0_i32 = arith.constant 0 : i32
    %c0_i32_0 = arith.constant 0 : i32
    %c0_i32_1 = arith.constant 0 : i32
    return %arg0, %c0_i32, %c0_i32_0 : i32, i32, i32
  }
}

</mosaic_0001>

<llo_original>
// kernel: tpu_custom_call.1
$region0: #{tpu_custom_call.1}
  #allocation0 [shape = 'u32[]', space=smem, size = 0x4, offset = 0x4, fixed_abs, tag = 'smem constant byte address 0x4 - core index']
  #allocation1 [shape = 'u32[72,128]{1,0:T(1,128)}', space=vmem, size = 0x9000, scoped, tag = 'internal scratch']
  #allocation2 [shape = 'f32[128,128]{1,0:T(8,128)}', space=vmem, size = 0x10000, scoped, tag = 'scratch operand']
  %s0 = inlined_call_operand.hbm [shape: f32[16,32,128], index: 0, kind: input, shape index: {}]
  %s1 = inlined_call_operand.hbm [shape: f32[1,128], index: 1, kind: input, shape index: {}]
  %s2 = inlined_call_operand.vmem [shape: f32[1,128], index: 2, kind: input, shape index: {}]
  %s3 = inlined_call_operand.hbm [shape: f32[128,128], index: 3, kind: input, shape index: {}]
  %s4 = inlined_call_operand.vmem [shape: f32[1,128], index: 4, kind: input, shape index: {}]
  %s5 = inlined_call_operand.hbm [shape: f32[16,8,128], index: 5, kind: output, shape index: {}]
  %s6 = sld [smem:[#allocation0]]
  $region65: #{tpu_custom_call.1} parent=0
    _
  %s8 = ssub.s32 1, %s6
  %s9 = scalar_select 0, %s8, %s6
  $region1: #{tpu_custom_call.1} parent=0
    #allocation3 [shape = 'u8[262144]{0}', space=vmem, size = 0x40000, scoped, tag = 'input window, operand 0']
    #allocation4 [shape = 's32[2]{0}', space=sflag, size = 0x8, scoped, tag = 'scoped memory for tpu_custom_call.1']
    #allocation5 [shape = 's32[2]{0}', space=sflag, size = 0x8, scoped, tag = 'scoped memory for tpu_custom_call.1']
    #allocation6 [shape = 'u8[512]{0}', space=vmem, size = 0x400, scoped, tag = 'input window, operand 1, single buffered']
    #allocation7 [shape = 's32[1]{0}', space=sflag, size = 0x4, scoped, tag = 'scoped memory for tpu_custom_call.1']
    #allocation8 [shape = 'u8[65536]{0}', space=vmem, size = 0x10000, scoped, tag = 'input window, operand 3, single buffered']
    #allocation9 [shape = 'u8[65536]{0}', space=vmem, size = 0x10000, scoped, tag = 'output window, operand 0']
    %10 = vsyncpa [#allocation4], 0
    %s11 = scalar_lea.sflag [#allocation4], 1
    %12 = vsyncpa %s11, 0
    %13 = vsyncpa [#allocation7], 0
    %14 = vsyncpa [#allocation5], 0
    %s15 = scalar_lea.sflag [#allocation5], 1
    %16 = vsyncpa %s15, 0
    loop: start=0, step=1, limit=4
    $region2: #{tpu_custom_call.1} parent=1 // loop_pre_header
      _
    $region3: #{tpu_custom_call.1} parent=1 // loop_header
      %s18 = sphi 0, %s22
      %p19 = scmp.ge.s32.totalorder %s18, 4
      %s28 = sphi 0, %s30
      %s31 = sphi 0, %s28
      %s32 = sphi 0, %s31
      %s48 = sphi 0, %s32
      %s52 = sphi 0, %s52
      %s54 = sphi 0, %s52
      %s55 = sphi 0, %s54
      %s69 = sphi 0, %s55
      %s73 = sphi 0, %s73
      %s75 = sphi 0, %s73
      %s76 = sphi 0, %s75
      %s90 = sphi 0, %s76
      %s94 = sphi 0, %s94
      %s96 = sphi 0, %s94
      %s97 = sphi 0, %s96
      %s111 = sphi 0, %s97
      %s115 = sphi 0, %s115
      %s117 = sphi 0, %s115
      %s118 = sphi 0, %s117
      %s132 = sphi 0, %s118
      %s138 = sphi 0, %s140
      %s141 = sphi 0, %s138
      %s142 = sphi 0, %s141
      %s158 = sphi 0, %s142
    $region4: #{tpu_custom_call.1} parent=1 // loop_header_branch
      %21 = sbr.rel (%p19) target = $region8
    $region5: #{tpu_custom_call.1} parent=1 // loop_body
      %s23 = ssub.s32 %s18, 1
      %s24 = ssub.s32 %s18, 2
      %s25 = sadd.s32 %s18, 1
      %s26 = ssub.s32 %s18, %s25
      %p27 = scmp.eq.s32.totalorder %s26, 0
      %s29 = sadd.s32 %s28, 1
      %s30 = scalar_select %p27, %s28, %s29
      %p33 = pneg %p27
      %p34 = scmp.eq.s32.totalorder %s18, 1
      %p35 = por %p33, %p34
      %p36 = scmp.ne.s32.totalorder %s28, %s31
      %p37 = scmp.eq.s32.totalorder %s18, 0
      %p38 = por %p36, %p37
      %p39 = scmp.ne.s32.totalorder %s28, %s31
      %p40 = scmp.eq.s32.totalorder %s23, 1
      %p41 = por %p39, %p40
      %p42 = scmp.ne.s32.totalorder %s31, %s32
      %p43 = scmp.eq.s32.totalorder %s23, 0
      %p44 = por %p42, %p43
      %p45 = scmp.ne.s32.totalorder %s31, %s32
      %p46 = scmp.eq.s32.totalorder %s24, 1
      %p47 = por %p45, %p46
      %p49 = scmp.ne.s32.totalorder %s32, %s48
      %p50 = scmp.eq.s32.totalorder %s24, 0
      %p51 = por %p49, %p50
      %s53 = sadd.s32 %s52, 1
      %p56 = scmp.eq.s32.totalorder %s18, 1
      %p57 = scmp.ne.s32.totalorder %s52, %s54
      %p58 = scmp.eq.s32.totalorder %s18, 0
      %p59 = por %p57, %p58
      %p60 = scmp.ne.s32.totalorder %s52, %s54
      %p61 = scmp.eq.s32.totalorder %s23, 1
      %p62 = por %p60, %p61
      %p63 = scmp.ne.s32.totalorder %s54, %s55
      %p64 = scmp.eq.s32.totalorder %s23, 0
      %p65 = por %p63, %p64
      %p66 = scmp.ne.s32.totalorder %s54, %s55
      %p67 = scmp.eq.s32.totalorder %s24, 1
      %p68 = por %p66, %p67
      %p70 = scmp.ne.s32.totalorder %s55, %s69
      %p71 = scmp.eq.s32.totalorder %s24, 0
      %p72 = por %p70, %p71
      %s74 = sadd.s32 %s73, 1
      %p77 = scmp.eq.s32.totalorder %s18, 1
      %p78 = scmp.ne.s32.totalorder %s73, %s75
      %p79 = scmp.eq.s32.totalorder %s18, 0
      %p80 = por %p78, %p79
      %p81 = scmp.ne.s32.totalorder %s73, %s75
      %p82 = scmp.eq.s32.totalorder %s23, 1
      %p83 = por %p81, %p82
      %p84 = scmp.ne.s32.totalorder %s75, %s76
      %p85 = scmp.eq.s32.totalorder %s23, 0
      %p86 = por %p84, %p85
      %p87 = scmp.ne.s32.totalorder %s75, %s76
      %p88 = scmp.eq.s32.totalorder %s24, 1
      %p89 = por %p87, %p88
      %p91 = scmp.ne.s32.totalorder %s76, %s90
      %p92 = scmp.eq.s32.totalorder %s24, 0
      %p93 = por %p91, %p92
      %s95 = sadd.s32 %s94, 1
      %p98 = scmp.eq.s32.totalorder %s18, 1
      %p99 = scmp.ne.s32.totalorder %s94, %s96
      %p100 = scmp.eq.s32.totalorder %s18, 0
      %p101 = por %p99, %p100
      %p102 = scmp.ne.s32.totalorder %s94, %s96
      %p103 = scmp.eq.s32.totalorder %s23, 1
      %p104 = por %p102, %p103
      %p105 = scmp.ne.s32.totalorder %s96, %s97
      %p106 = scmp.eq.s32.totalorder %s23, 0
      %p107 = por %p105, %p106
      %p108 = scmp.ne.s32.totalorder %s96, %s97
      %p109 = scmp.eq.s32.totalorder %s24, 1
      %p110 = por %p108, %p109
      %p112 = scmp.ne.s32.totalorder %s97, %s111
      %p113 = scmp.eq.s32.totalorder %s24, 0
      %p114 = por %p112, %p113
      %s116 = sadd.s32 %s115, 1
      %p119 = scmp.eq.s32.totalorder %s18, 1
      %p120 = scmp.ne.s32.totalorder %s115, %s117
      %p121 = scmp.eq.s32.totalorder %s18, 0
      %p122 = por %p120, %p121
      %p123 = scmp.ne.s32.totalorder %s115, %s117
      %p124 = scmp.eq.s32.totalorder %s23, 1
      %p125 = por %p123, %p124
      %p126 = scmp.ne.s32.totalorder %s117, %s118
      %p127 = scmp.eq.s32.totalorder %s23, 0
      %p128 = por %p126, %p127
      %p129 = scmp.ne.s32.totalorder %s117, %s118
      %p130 = scmp.eq.s32.totalorder %s24, 1
      %p131 = por %p129, %p130
      %p133 = scmp.ne.s32.totalorder %s118, %s132
      %p134 = scmp.eq.s32.totalorder %s24, 0
      %p135 = por %p133, %p134
      %s136 = ssub.s32 %s18, %s25
      %p137 = scmp.eq.s32.totalorder %s136, 0
      %s139 = sadd.s32 %s138, 1
      %s140 = scalar_select %p137, %s138, %s139
      %p143 = pneg %p137
      %p144 = scmp.eq.s32.totalorder %s18, 1
      %p145 = por %p143, %p144
      %p146 = scmp.ne.s32.totalorder %s138, %s141
      %p147 = scmp.eq.s32.totalorder %s18, 0
      %p148 = por %p146, %p147
      %p149 = scmp.ne.s32.totalorder %s138, %s141
      %p150 = scmp.eq.s32.totalorder %s23, 1
      %p151 = por %p149, %p150
      %p152 = scmp.ne.s32.totalorder %s141, %s142
      %p153 = scmp.eq.s32.totalorder %s23, 0
      %p154 = por %p152, %p153
      %p155 = scmp.ne.s32.totalorder %s141, %s142
      %p156 = scmp.eq.s32.totalorder %s24, 1
      %p157 = por %p155, %p156
      %p159 = scmp.ne.s32.totalorder %s142, %s158
      %p160 = scmp.eq.s32.totalorder %s24, 0
      %p161 = por %p159, %p160
      %p162 = scmp.le.s32.totalorder 1, %s18
      %p163 = scmp.lt.s32.totalorder %s18, 3
      %p164 = pnand %p162, %p163
      %p165 = pneg %p164
      // Predicated region
      $region9: #{tpu_custom_call.1} parent=5 // pred_check
        _
      $region10: #{tpu_custom_call.1} parent=5 // pred_check_branch
        %167 = sbr.rel (%p164) target = $region12
      $region11: #{tpu_custom_call.1} parent=5 // pred_region
        %s168 = ssub.s32 %s18, 1
        // Predicated region
        $region13: #{tpu_custom_call.1} parent=11 // pred_check
          %p169 = pneg %p65
        $region14: #{tpu_custom_call.1} parent=11 // pred_check_branch
          %171 = sbr.rel (%p169) target = $region16
        $region15: #{tpu_custom_call.1} parent=11 // pred_region
          %173 = vsyncadd [#allocation7], 0
          %s175 = sshll.u32 %s1, 4
          %s176 = int_to_ptr.hbm [resolvable:$true] %s175
          %s177 = sshll.u32 [#allocation6], 4
          %s178 = int_to_ptr.vmem [resolvable:$true] %s177
          %180 = dma.hbm_to_vmem [thread:$0]  %s176, 16, %s178, [#allocation7]
        $region16: #{tpu_custom_call.1} parent=11 // pred_fallthru
          _
        // Predicated region
        $region17: #{tpu_custom_call.1} parent=11 // pred_check
          %p181 = pneg %p86
        $region18: #{tpu_custom_call.1} parent=11 // pred_check_branch
          %183 = sbr.rel (%p181) target = $region20
        $region19: #{tpu_custom_call.1} parent=11 // pred_region
          _
        $region20: #{tpu_custom_call.1} parent=11 // pred_fallthru
          _
        // Predicated region
        $region21: #{tpu_custom_call.1} parent=11 // pred_check
          %p184 = pneg %p107
        $region22: #{tpu_custom_call.1} parent=11 // pred_check_branch
          %186 = sbr.rel (%p184) target = $region24
        $region23: #{tpu_custom_call.1} parent=11 // pred_region
          %188 = vsyncadd [#allocation7], 0
          %s189 = sshll.u32 %s3, 4
          %s190 = int_to_ptr.hbm [resolvable:$true] %s189
          %s191 = sshll.u32 [#allocation8], 4
          %s192 = int_to_ptr.vmem [resolvable:$true] %s191
          %197 = dma.hbm_to_vmem [thread:$0]  %s190, 2048, %s192, [#allocation7], 128, 128, 8
        $region24: #{tpu_custom_call.1} parent=11 // pred_fallthru
          _
        // Predicated region
        $region25: #{tpu_custom_call.1} parent=11 // pred_check
          %p198 = pneg %p128
        $region26: #{tpu_custom_call.1} parent=11 // pred_check_branch
          %200 = sbr.rel (%p198) target = $region28
        $region27: #{tpu_custom_call.1} parent=11 // pred_region
          _
        $region28: #{tpu_custom_call.1} parent=11 // pred_fallthru
          _
      $region12: #{tpu_custom_call.1} parent=5 // pred_fallthru
        _
      %p201 = scmp.lt.s32.totalorder %s18, 2
      // Predicated region
      $region29: #{tpu_custom_call.1} parent=5 // pred_check
        %p202 = pneg %p201
      $region30: #{tpu_custom_call.1} parent=5 // pred_check_branch
        %204 = sbr.rel (%p202) target = $region32
      $region31: #{tpu_custom_call.1} parent=5 // pred_region
        // Predicated region
        $region33: #{tpu_custom_call.1} parent=31 // pred_check
          %p205 = pneg %p38
        $region34: #{tpu_custom_call.1} parent=31 // pred_check_branch
          %207 = sbr.rel (%p205) target = $region36
        $region35: #{tpu_custom_call.1} parent=31 // pred_region
          %s208 = sand.u32 %s28, 1
          %s209 = scalar_lea.sflag [#allocation4], %s208
          %s210 = sand.u32 %s28, 1
          %s211 = smul.addr %s210, 256
          %s212 = scalar_lea.vmem [#allocation3], %s211
          %s213 = smul.u32 8, %s18
          %215 = vsyncadd %s209, 0
          %s216 = smul.addr %s213, 4
          %s217 = smul.addr %s216, 8
          %s218 = scalar_lea.hbm %s0, %s217
          %s219 = sshll.u32 %s218, 4
          %s220 = int_to_ptr.hbm [resolvable:$true] %s219
          %s221 = sshll.u32 %s212, 4
          %s222 = int_to_ptr.vmem [resolvable:$true] %s221
          %227 = dma.hbm_to_vmem [thread:$0]  %s220, 4096, %s222, %s209, 128, 128, 8
        $region36: #{tpu_custom_call.1} parent=31 // pred_fallthru
          _
      $region32: #{tpu_custom_call.1} parent=5 // pred_fallthru
        _
      %p228 = scmp.le.s32.totalorder 1, %s18
      %p229 = scmp.lt.s32.totalorder %s18, 3
      %p230 = pnand %p228, %p229
      %p231 = pneg %p230
      // Predicated region
      $region37: #{tpu_custom_call.1} parent=5 // pred_check
        _
      $region38: #{tpu_custom_call.1} parent=5 // pred_check_branch
        %233 = sbr.rel (%p230) target = $region40
      $region39: #{tpu_custom_call.1} parent=5 // pred_region
        %s234 = ssub.s32 %s18, 1
        %s235 = sand.u32 %s31, 1
        %s236 = scalar_lea.sflag [#allocation4], %s235
        %s237 = sand.u32 %s31, 1
        %s238 = smul.addr %s237, 256
        %s239 = scalar_lea.vmem [#allocation3], %s238
        // Predicated region
        $region41: #{tpu_custom_call.1} parent=39 // pred_check
          %p240 = pneg %p44
        $region42: #{tpu_custom_call.1} parent=39 // pred_check_branch
          %242 = sbr.rel (%p240) target = $region44
        $region43: #{tpu_custom_call.1} parent=39 // pred_region
          %244 = dma.done %s236, 4096
        $region44: #{tpu_custom_call.1} parent=39 // pred_fallthru
          _
        // Predicated region
        $region45: #{tpu_custom_call.1} parent=39 // pred_check
          %p245 = pneg %p65
        $region46: #{tpu_custom_call.1} parent=39 // pred_check_branch
          %247 = sbr.rel (%p245) target = $region48
        $region47: #{tpu_custom_call.1} parent=39 // pred_region
          %249 = dma.done [#allocation7], 16
        $region48: #{tpu_custom_call.1} parent=39 // pred_fallthru
          _
        // Predicated region
        $region49: #{tpu_custom_call.1} parent=39 // pred_check
          %p250 = pneg %p107
        $region50: #{tpu_custom_call.1} parent=39 // pred_check_branch
          %252 = sbr.rel (%p250) target = $region52
        $region51: #{tpu_custom_call.1} parent=39 // pred_region
          %254 = dma.done [#allocation7], 2048
        $region52: #{tpu_custom_call.1} parent=39 // pred_fallthru
          _
        %s255 = sand.u32 %s31, 1
        %s256 = scalar_lea.sflag [#allocation4], %s255
        %s257 = sand.u32 %s31, 1
        %s258 = smul.addr %s257, 256
        %s259 = scalar_lea.vmem [#allocation3], %s258
        %p260 = pneg %p44
        %p261 = pneg %p41
        %p262 = pneg %p65
        %p263 = pneg %p62
        %p264 = pneg %p86
        %p265 = pneg %p83
        %p266 = pneg %p107
        %p267 = pneg %p104
        %p268 = pneg %p128
        %p269 = pneg %p125
        %p270 = pneg %p154
        %p271 = pneg %p151
        %s272 = sand.u32 %s141, 1
        %s273 = scalar_lea.sflag [#allocation5], %s272
        %s274 = sand.u32 %s141, 1
        %s275 = smul.addr %s274, 64
        %s276 = scalar_lea.vmem [#allocation9], %s275
        %s277 = smul.u32 8, %s23
        %s278 = smul.u32 8, %s23
        %v279 = vld [vmem:[#allocation6] sm:$0x1]
        %v280 = vld [vmem:[%s2] sm:$0x1]
        %v281 = vld [vmem:[#allocation8] sm:$0xff]
        %v282 = vld [vmem:[#allocation8 + $0x8] sm:$0xff]
        %v283 = vld [vmem:[#allocation8 + $0x10] sm:$0xff]
        %v284 = vld [vmem:[#allocation8 + $0x18] sm:$0xff]
        %v285 = vld [vmem:[#allocation8 + $0x20] sm:$0xff]
        %v286 = vld [vmem:[#allocation8 + $0x28] sm:$0xff]
        %v287 = vld [vmem:[#allocation8 + $0x30] sm:$0xff]
        %v288 = vld [vmem:[#allocation8 + $0x38] sm:$0xff]
        %v289 = vld [vmem:[#allocation8 + $0x40] sm:$0xff]
        %v290 = vld [vmem:[#allocation8 + $0x48] sm:$0xff]
        %v291 = vld [vmem:[#allocation8 + $0x50] sm:$0xff]
        %v292 = vld [vmem:[#allocation8 + $0x58] sm:$0xff]
        %v293 = vld [vmem:[#allocation8 + $0x60] sm:$0xff]
        %v294 = vld [vmem:[#allocation8 + $0x68] sm:$0xff]
        %v295 = vld [vmem:[#allocation8 + $0x70] sm:$0xff]
        %v296 = vld [vmem:[#allocation8 + $0x78] sm:$0xff]
        %v297 = vld [vmem:[%s4] sm:$0x1]
        %v298 = vld [vmem:[%s239] sm:$0xff]
        %v299 = vld [vmem:[%s239 + $0x8] sm:$0xff]
        %v300 = vld [vmem:[%s239 + $0x20] sm:$0xff]
        %v301 = vld [vmem:[%s239 + $0x28] sm:$0xff]
        %v302 = vld [vmem:[%s239 + $0x40] sm:$0xff]
        %v303 = vld [vmem:[%s239 + $0x48] sm:$0xff]
        %v304 = vld [vmem:[%s239 + $0x60] sm:$0xff]
        %v305 = vld [vmem:[%s239 + $0x68] sm:$0xff]
        %v306 = vld [vmem:[%s239 + $0x80] sm:$0xff]
        %v307 = vld [vmem:[%s239 + $0x88] sm:$0xff]
        %v308 = vld [vmem:[%s239 + $0xa0] sm:$0xff]
        %v309 = vld [vmem:[%s239 + $0xa8] sm:$0xff]
        %v310 = vld [vmem:[%s239 + $0xc0] sm:$0xff]
        %v311 = vld [vmem:[%s239 + $0xc8] sm:$0xff]
        %v312 = vld [vmem:[%s239 + $0xe0] sm:$0xff]
        %v313 = vld [vmem:[%s239 + $0xe8] sm:$0xff]
        %v315 = vperm.slane %v279, 0
        %v317 = vmul.f32 %v298, %v315
        %v318 = vmul.f32 %v299, %v315
        %v319 = vmul.f32 %v300, %v315
        %v320 = vmul.f32 %v301, %v315
        %v321 = vmul.f32 %v302, %v315
        %v322 = vmul.f32 %v303, %v315
        %v323 = vmul.f32 %v304, %v315
        %v324 = vmul.f32 %v305, %v315
        %v325 = vmul.f32 %v306, %v315
        %v326 = vmul.f32 %v307, %v315
        %v327 = vmul.f32 %v308, %v315
        %v328 = vmul.f32 %v309, %v315
        %v329 = vmul.f32 %v310, %v315
        %v330 = vmul.f32 %v311, %v315
        %v331 = vmul.f32 %v312, %v315
        %v332 = vmul.f32 %v313, %v315
        %v334 = vperm.slane %v280, 0
        %v336 = vadd.f32 %v317, %v334
        %v337 = vadd.f32 %v318, %v334
        %v338 = vadd.f32 %v319, %v334
        %v339 = vadd.f32 %v320, %v334
        %v340 = vadd.f32 %v321, %v334
        %v341 = vadd.f32 %v322, %v334
        %v342 = vadd.f32 %v323, %v334
        %v343 = vadd.f32 %v324, %v334
        %v344 = vadd.f32 %v325, %v334
        %v345 = vadd.f32 %v326, %v334
        %v346 = vadd.f32 %v327, %v334
        %v347 = vadd.f32 %v328, %v334
        %v348 = vadd.f32 %v329, %v334
        %v349 = vadd.f32 %v330, %v334
        %v350 = vadd.f32 %v331, %v334
        %v351 = vadd.f32 %v332, %v334
        %v352 = vmax.f32 %v336, 0.0
        %v353 = vmax.f32 %v337, 0.0
        %v354 = vmax.f32 %v338, 0.0
        %v355 = vmax.f32 %v339, 0.0
        %v356 = vmax.f32 %v340, 0.0
        %v357 = vmax.f32 %v341, 0.0
        %v358 = vmax.f32 %v342, 0.0
        %v359 = vmax.f32 %v343, 0.0
        %v360 = vmax.f32 %v344, 0.0
        %v361 = vmax.f32 %v345, 0.0
        %v362 = vmax.f32 %v346, 0.0
        %v363 = vmax.f32 %v347, 0.0
        %v364 = vmax.f32 %v348, 0.0
        %v365 = vmax.f32 %v349, 0.0
        %v366 = vmax.f32 %v350, 0.0
        %v367 = vmax.f32 %v351, 0.0
        %v369 = vperm.slane %v297, 0
        %371 = vmatpush.msra.mxu0 %v296
        %372 = vmatpush.msra.mxu0 %v295
        %373 = vmatpush.msra.mxu0 %v294
        %374 = vmatpush.msra.mxu0 %v293
        %375 = vmatpush.msra.mxu0 %v292
        %376 = vmatpush.msra.mxu0 %v291
        %377 = vmatpush.msra.mxu0 %v290
        %378 = vmatpush.msra.mxu0 %v289
        %379 = vmatpush.msra.mxu0 %v288
        %380 = vmatpush.msra.mxu0 %v287
        %381 = vmatpush.msra.mxu0 %v286
        %382 = vmatpush.msra.mxu0 %v285
        %383 = vmatpush.msra.mxu0 %v284
        %384 = vmatpush.msra.mxu0 %v283
        %385 = vmatpush.msra.mxu0 %v282
        %386 = vmatpush.msra.mxu0 %v281
        %387 = vmatmul.f32.gmra.mxu0 %v352
        %v388 = vpop.f32.mrf.mxu0
        %v389 = vadd.f32 %v369, %v388
        %390 = vmatmul.f32.gmra.mxu0 %v353
        %v391 = vpop.f32.mrf.mxu0
        %v392 = vadd.f32 %v369, %v391
        %393 = vmatmul.f32.gmra.mxu0 %v354
        %v394 = vpop.f32.mrf.mxu0
        %v395 = vadd.f32 %v369, %v394
        %396 = vmatmul.f32.gmra.mxu0 %v355
        %v397 = vpop.f32.mrf.mxu0
        %v398 = vadd.f32 %v369, %v397
        %399 = vmatmul.f32.gmra.mxu0 %v356
        %v400 = vpop.f32.mrf.mxu0
        %v401 = vadd.f32 %v369, %v400
        %402 = vmatmul.f32.gmra.mxu0 %v357
        %v403 = vpop.f32.mrf.mxu0
        %v404 = vadd.f32 %v369, %v403
        %405 = vmatmul.f32.gmra.mxu0 %v358
        %v406 = vpop.f32.mrf.mxu0
        %v407 = vadd.f32 %v369, %v406
        %408 = vmatmul.f32.gmra.mxu0 %v359
        %v409 = vpop.f32.mrf.mxu0
        %v410 = vadd.f32 %v369, %v409
        %411 = vmatmul.f32.gmra.mxu0 %v360
        %v412 = vpop.f32.mrf.mxu0
        %v413 = vadd.f32 %v369, %v412
        %414 = vmatmul.f32.gmra.mxu0 %v361
        %v415 = vpop.f32.mrf.mxu0
        %v416 = vadd.f32 %v369, %v415
        %417 = vmatmul.f32.gmra.mxu0 %v362
        %v418 = vpop.f32.mrf.mxu0
        %v419 = vadd.f32 %v369, %v418
        %420 = vmatmul.f32.gmra.mxu0 %v363
        %v421 = vpop.f32.mrf.mxu0
        %v422 = vadd.f32 %v369, %v421
        %423 = vmatmul.f32.gmra.mxu0 %v364
        %v424 = vpop.f32.mrf.mxu0
        %v425 = vadd.f32 %v369, %v424
        %426 = vmatmul.f32.gmra.mxu0 %v365
        %v427 = vpop.f32.mrf.mxu0
        %v428 = vadd.f32 %v369, %v427
        %429 = vmatmul.f32.gmra.mxu0 %v366
        %v430 = vpop.f32.mrf.mxu0
        %v431 = vadd.f32 %v369, %v430
        %432 = vmatmul.f32.gmra.mxu0 %v367
        %v433 = vpop.f32.mrf.mxu0
        %v434 = vadd.f32 %v369, %v433
        %435 = vdwg.mxu0
        %v436 = vmax.f32 %v389, 0.0
        %v437 = vmax.f32 %v392, 0.0
        %v438 = vmax.f32 %v395, 0.0
        %v439 = vmax.f32 %v398, 0.0
        %v440 = vmax.f32 %v401, 0.0
        %v441 = vmax.f32 %v404, 0.0
        %v442 = vmax.f32 %v407, 0.0
        %v443 = vmax.f32 %v410, 0.0
        %v444 = vmax.f32 %v413, 0.0
        %v445 = vmax.f32 %v416, 0.0
        %v446 = vmax.f32 %v419, 0.0
        %v447 = vmax.f32 %v422, 0.0
        %v448 = vmax.f32 %v425, 0.0
        %v449 = vmax.f32 %v428, 0.0
        %v450 = vmax.f32 %v431, 0.0
        %v451 = vmax.f32 %v434, 0.0
        %v452 = vld [vmem:[%s239 + $0x10] sm:$0xff]
        %v453 = vld [vmem:[%s239 + $0x18] sm:$0xff]
        %v454 = vld [vmem:[%s239 + $0x30] sm:$0xff]
        %v455 = vld [vmem:[%s239 + $0x38] sm:$0xff]
        %v456 = vld [vmem:[%s239 + $0x50] sm:$0xff]
        %v457 = vld [vmem:[%s239 + $0x58] sm:$0xff]
        %v458 = vld [vmem:[%s239 + $0x70] sm:$0xff]
        %v459 = vld [vmem:[%s239 + $0x78] sm:$0xff]
        %v460 = vld [vmem:[%s239 + $0x90] sm:$0xff]
        %v461 = vld [vmem:[%s239 + $0x98] sm:$0xff]
        %v462 = vld [vmem:[%s239 + $0xb0] sm:$0xff]
        %v463 = vld [vmem:[%s239 + $0xb8] sm:$0xff]
        %v464 = vld [vmem:[%s239 + $0xd0] sm:$0xff]
        %v465 = vld [vmem:[%s239 + $0xd8] sm:$0xff]
        %v466 = vld [vmem:[%s239 + $0xf0] sm:$0xff]
        %v467 = vld [vmem:[%s239 + $0xf8] sm:$0xff]
        %v468 = vmul.f32 %v452, %v315
        %v469 = vmul.f32 %v453, %v315
        %v470 = vmul.f32 %v454, %v315
        %v471 = vmul.f32 %v455, %v315
        %v472 = vmul.f32 %v456, %v315
        %v473 = vmul.f32 %v457, %v315
        %v474 = vmul.f32 %v458, %v315
        %v475 = vmul.f32 %v459, %v315
        %v476 = vmul.f32 %v460, %v315
        %v477 = vmul.f32 %v461, %v315
        %v478 = vmul.f32 %v462, %v315
        %v479 = vmul.f32 %v463, %v315
        %v480 = vmul.f32 %v464, %v315
        %v481 = vmul.f32 %v465, %v315
        %v482 = vmul.f32 %v466, %v315
        %v483 = vmul.f32 %v467, %v315
        %v484 = vadd.f32 %v468, %v334
        %v485 = vadd.f32 %v469, %v334
        %v486 = vadd.f32 %v470, %v334
        %v487 = vadd.f32 %v471, %v334
        %v488 = vadd.f32 %v472, %v334
        %v489 = vadd.f32 %v473, %v334
        %v490 = vadd.f32 %v474, %v334
        %v491 = vadd.f32 %v475, %v334
        %v492 = vadd.f32 %v476, %v334
        %v493 = vadd.f32 %v477, %v334
        %v494 = vadd.f32 %v478, %v334
        %v495 = vadd.f32 %v479, %v334
        %v496 = vadd.f32 %v480, %v334
        %v497 = vadd.f32 %v481, %v334
        %v498 = vadd.f32 %v482, %v334
        %v499 = vadd.f32 %v483, %v334
        %v500 = vmax.f32 %v484, 0.0
        %v501 = vmax.f32 %v485, 0.0
        %v502 = vmax.f32 %v486, 0.0
        %v503 = vmax.f32 %v487, 0.0
        %v504 = vmax.f32 %v488, 0.0
        %v505 = vmax.f32 %v489, 0.0
        %v506 = vmax.f32 %v490, 0.0
        %v507 = vmax.f32 %v491, 0.0
        %v508 = vmax.f32 %v492, 0.0
        %v509 = vmax.f32 %v493, 0.0
        %v510 = vmax.f32 %v494, 0.0
        %v511 = vmax.f32 %v495, 0.0
        %v512 = vmax.f32 %v496, 0.0
        %v513 = vmax.f32 %v497, 0.0
        %v514 = vmax.f32 %v498, 0.0
        %v515 = vmax.f32 %v499, 0.0
        %516 = vmatpush.msra.mxu0 %v296
        %517 = vmatpush.msra.mxu0 %v295
        %518 = vmatpush.msra.mxu0 %v294
        %519 = vmatpush.msra.mxu0 %v293
        %520 = vmatpush.msra.mxu0 %v292
        %521 = vmatpush.msra.mxu0 %v291
        %522 = vmatpush.msra.mxu0 %v290
        %523 = vmatpush.msra.mxu0 %v289
        %524 = vmatpush.msra.mxu0 %v288
        %525 = vmatpush.msra.mxu0 %v287
        %526 = vmatpush.msra.mxu0 %v286
        %527 = vmatpush.msra.mxu0 %v285
        %528 = vmatpush.msra.mxu0 %v284
        %529 = vmatpush.msra.mxu0 %v283
        %530 = vmatpush.msra.mxu0 %v282
        %531 = vmatpush.msra.mxu0 %v281
        %532 = vmatmul.f32.gmra.mxu0 %v500
        %v533 = vpop.f32.mrf.mxu0
        %v534 = vadd.f32 %v369, %v533
        %535 = vmatmul.f32.gmra.mxu0 %v501
        %v536 = vpop.f32.mrf.mxu0
        %v537 = vadd.f32 %v369, %v536
        %538 = vmatmul.f32.gmra.mxu0 %v502
        %v539 = vpop.f32.mrf.mxu0
        %v540 = vadd.f32 %v369, %v539
        %541 = vmatmul.f32.gmra.mxu0 %v503
        %v542 = vpop.f32.mrf.mxu0
        %v543 = vadd.f32 %v369, %v542
        %544 = vmatmul.f32.gmra.mxu0 %v504
        %v545 = vpop.f32.mrf.mxu0
        %v546 = vadd.f32 %v369, %v545
        %547 = vmatmul.f32.gmra.mxu0 %v505
        %v548 = vpop.f32.mrf.mxu0
        %v549 = vadd.f32 %v369, %v548
        %550 = vmatmul.f32.gmra.mxu0 %v506
        %v551 = vpop.f32.mrf.mxu0
        %v552 = vadd.f32 %v369, %v551
        %553 = vmatmul.f32.gmra.mxu0 %v507
        %v554 = vpop.f32.mrf.mxu0
        %v555 = vadd.f32 %v369, %v554
        %556 = vmatmul.f32.gmra.mxu0 %v508
        %v557 = vpop.f32.mrf.mxu0
        %v558 = vadd.f32 %v369, %v557
        %559 = vmatmul.f32.gmra.mxu0 %v509
        %v560 = vpop.f32.mrf.mxu0
        %v561 = vadd.f32 %v369, %v560
        %562 = vmatmul.f32.gmra.mxu0 %v510
        %v563 = vpop.f32.mrf.mxu0
        %v564 = vadd.f32 %v369, %v563
        %565 = vmatmul.f32.gmra.mxu0 %v511
        %v566 = vpop.f32.mrf.mxu0
        %v567 = vadd.f32 %v369, %v566
        %568 = vmatmul.f32.gmra.mxu0 %v512
        %v569 = vpop.f32.mrf.mxu0
        %v570 = vadd.f32 %v369, %v569
        %571 = vmatmul.f32.gmra.mxu0 %v513
        %v572 = vpop.f32.mrf.mxu0
        %v573 = vadd.f32 %v369, %v572
        %574 = vmatmul.f32.gmra.mxu0 %v514
        %v575 = vpop.f32.mrf.mxu0
        %v576 = vadd.f32 %v369, %v575
        %577 = vmatmul.f32.gmra.mxu0 %v515
        %v578 = vpop.f32.mrf.mxu0
        %v579 = vadd.f32 %v369, %v578
        %580 = vdwg.mxu0
        %v581 = vmax.f32 %v534, 0.0
        %v582 = vmax.f32 %v537, 0.0
        %v583 = vmax.f32 %v540, 0.0
        %v584 = vmax.f32 %v543, 0.0
        %v585 = vmax.f32 %v546, 0.0
        %v586 = vmax.f32 %v549, 0.0
        %v587 = vmax.f32 %v552, 0.0
        %v588 = vmax.f32 %v555, 0.0
        %v589 = vmax.f32 %v558, 0.0
        %v590 = vmax.f32 %v561, 0.0
        %v591 = vmax.f32 %v564, 0.0
        %v592 = vmax.f32 %v567, 0.0
        %v593 = vmax.f32 %v570, 0.0
        %v594 = vmax.f32 %v573, 0.0
        %v595 = vmax.f32 %v576, 0.0
        %v596 = vmax.f32 %v579, 0.0
        %v597 = vadd.f32 %v436, %v581
        %v598 = vadd.f32 %v437, %v582
        %v599 = vadd.f32 %v438, %v583
        %v600 = vadd.f32 %v439, %v584
        %v601 = vadd.f32 %v440, %v585
        %v602 = vadd.f32 %v441, %v586
        %v603 = vadd.f32 %v442, %v587
        %v604 = vadd.f32 %v443, %v588
        %v605 = vadd.f32 %v444, %v589
        %v606 = vadd.f32 %v445, %v590
        %v607 = vadd.f32 %v446, %v591
        %v608 = vadd.f32 %v447, %v592
        %v609 = vadd.f32 %v448, %v593
        %v610 = vadd.f32 %v449, %v594
        %v611 = vadd.f32 %v450, %v595
        %v612 = vadd.f32 %v451, %v596
        %613 = vst [vmem:[#allocation2] sm:$0xff] %v597
        %614 = vst [vmem:[#allocation2 + $0x8] sm:$0xff] %v598
        %615 = vst [vmem:[#allocation2 + $0x10] sm:$0xff] %v599
        %616 = vst [vmem:[#allocation2 + $0x18] sm:$0xff] %v600
        %617 = vst [vmem:[#allocation2 + $0x20] sm:$0xff] %v601
        %618 = vst [vmem:[#allocation2 + $0x28] sm:$0xff] %v602
        %619 = vst [vmem:[#allocation2 + $0x30] sm:$0xff] %v603
        %620 = vst [vmem:[#allocation2 + $0x38] sm:$0xff] %v604
        %621 = vst [vmem:[#allocation2 + $0x40] sm:$0xff] %v605
        %622 = vst [vmem:[#allocation2 + $0x48] sm:$0xff] %v606
        %623 = vst [vmem:[#allocation2 + $0x50] sm:$0xff] %v607
        %624 = vst [vmem:[#allocation2 + $0x58] sm:$0xff] %v608
        %625 = vst [vmem:[#allocation2 + $0x60] sm:$0xff] %v609
        %626 = vst [vmem:[#allocation2 + $0x68] sm:$0xff] %v610
        %627 = vst [vmem:[#allocation2 + $0x70] sm:$0xff] %v611
        %628 = vst [vmem:[#allocation2 + $0x78] sm:$0xff] %v612
        %v629 = vld [vmem:[#allocation2] ss:$2 sm:$0xff]
        %s630 = scalar_lea.vmem [#allocation2], 16
        %v631 = vld [vmem:[%s630] ss:$2 sm:$0xff]
        %s632 = scalar_lea.vmem [#allocation2], 32
        %v633 = vld [vmem:[%s632] ss:$2 sm:$0xff]
        %s634 = scalar_lea.vmem [#allocation2], 48
        %v635 = vld [vmem:[%s634] ss:$2 sm:$0xff]
        %s636 = scalar_lea.vmem [#allocation2], 64
        %v637 = vld [vmem:[%s636] ss:$2 sm:$0xff]
        %s638 = scalar_lea.vmem [#allocation2], 80
        %v639 = vld [vmem:[%s638] ss:$2 sm:$0xff]
        %s640 = scalar_lea.vmem [#allocation2], 96
        %v641 = vld [vmem:[%s640] ss:$2 sm:$0xff]
        %s642 = scalar_lea.vmem [#allocation2], 112
        %v643 = vld [vmem:[%s642] ss:$2 sm:$0xff]
        %s644 = scalar_lea.vmem [#allocation2], 1
        %v645 = vld [vmem:[%s644] ss:$2 sm:$0xff]
        %s646 = scalar_lea.vmem [#allocation2], 17
        %v647 = vld [vmem:[%s646] ss:$2 sm:$0xff]
        %s648 = scalar_lea.vmem [#allocation2], 33
        %v649 = vld [vmem:[%s648] ss:$2 sm:$0xff]
        %s650 = scalar_lea.vmem [#allocation2], 49
        %v651 = vld [vmem:[%s650] ss:$2 sm:$0xff]
        %s652 = scalar_lea.vmem [#allocation2], 65
        %v653 = vld [vmem:[%s652] ss:$2 sm:$0xff]
        %s654 = scalar_lea.vmem [#allocation2], 81
        %v655 = vld [vmem:[%s654] ss:$2 sm:$0xff]
        %s656 = scalar_lea.vmem [#allocation2], 97
        %v657 = vld [vmem:[%s656] ss:$2 sm:$0xff]
        %s658 = scalar_lea.vmem [#allocation2], 113
        %v659 = vld [vmem:[%s658] ss:$2 sm:$0xff]
        %v660 = vadd.f32 %v629, %v645
        %v661 = vadd.f32 %v631, %v647
        %v662 = vadd.f32 %v633, %v649
        %v663 = vadd.f32 %v635, %v651
        %v664 = vadd.f32 %v637, %v653
        %v665 = vadd.f32 %v639, %v655
        %v666 = vadd.f32 %v641, %v657
        %v667 = vadd.f32 %v643, %v659
        %v668 = vmul.f32 %v660, 0.25
        %v669 = vmul.f32 %v661, 0.25
        %v670 = vmul.f32 %v662, 0.25
        %v671 = vmul.f32 %v663, 0.25
        %v672 = vmul.f32 %v664, 0.25
        %v673 = vmul.f32 %v665, 0.25
        %v674 = vmul.f32 %v666, 0.25
        %v675 = vmul.f32 %v667, 0.25
        %676 = vst [vmem:[%s276] sm:$0xff] %v668
        %677 = vst [vmem:[%s276 + $0x8] sm:$0xff] %v669
        %678 = vst [vmem:[%s276 + $0x10] sm:$0xff] %v670
        %679 = vst [vmem:[%s276 + $0x18] sm:$0xff] %v671
        %680 = vst [vmem:[%s276 + $0x20] sm:$0xff] %v672
        %681 = vst [vmem:[%s276 + $0x28] sm:$0xff] %v673
        %682 = vst [vmem:[%s276 + $0x30] sm:$0xff] %v674
        %683 = vst [vmem:[%s276 + $0x38] sm:$0xff] %v675
        %s684 = sand.u32 %s141, 1
        %s685 = scalar_lea.sflag [#allocation5], %s684
        %s686 = sand.u32 %s141, 1
        %s687 = smul.addr %s686, 64
        %s688 = scalar_lea.vmem [#allocation9], %s687
        // Predicated region
        $region53: #{tpu_custom_call.1} parent=39 // pred_check
          %p689 = pneg %p151
        $region54: #{tpu_custom_call.1} parent=39 // pred_check_branch
          %691 = sbr.rel (%p689) target = $region56
        $region55: #{tpu_custom_call.1} parent=39 // pred_region
          %s692 = smul.u32 8, %s23
          %694 = vsyncadd %s685, 0
          %s695 = smul.addr %s692, 8
          %s696 = scalar_lea.hbm %s5, %s695
          %s697 = sshll.u32 %s688, 4
          %s698 = int_to_ptr.vmem [resolvable:$true] %s697
          %s699 = sshll.u32 %s696, 4
          %s700 = int_to_ptr.hbm [resolvable:$true] %s699
          %705 = dma.vmem_to_hbm [thread:$0]  %s698, 1024, %s700, %s685, 128, 128, 8
        $region56: #{tpu_custom_call.1} parent=39 // pred_fallthru
          _
      $region40: #{tpu_custom_call.1} parent=5 // pred_fallthru
        _
      %p706 = scmp.le.s32.totalorder 2, %s18
      // Predicated region
      $region57: #{tpu_custom_call.1} parent=5 // pred_check
        %p707 = pneg %p706
      $region58: #{tpu_custom_call.1} parent=5 // pred_check_branch
        %709 = sbr.rel (%p707) target = $region60
      $region59: #{tpu_custom_call.1} parent=5 // pred_region
        %s710 = ssub.s32 %s18, 2
        // Predicated region
        $region61: #{tpu_custom_call.1} parent=59 // pred_check
          %p711 = pneg %p157
        $region62: #{tpu_custom_call.1} parent=59 // pred_check_branch
          %713 = sbr.rel (%p711) target = $region64
        $region63: #{tpu_custom_call.1} parent=59 // pred_region
          %s714 = sand.u32 %s142, 1
          %s715 = scalar_lea.sflag [#allocation5], %s714
          %s716 = sand.u32 %s142, 1
          %s717 = smul.addr %s716, 64
          %s718 = scalar_lea.vmem [#allocation9], %s717
          %720 = dma.done %s715, 1024
        $region64: #{tpu_custom_call.1} parent=59 // pred_fallthru
          _
      $region60: #{tpu_custom_call.1} parent=5 // pred_fallthru
        _
    $region6: #{tpu_custom_call.1} parent=1 // loop_footer
      %s22 = sadd.s32 1, %s18
    $region7: #{tpu_custom_call.1} parent=1 // loop_footer_branch
      %17 = sbr.rel target = $region3
    $region8: #{tpu_custom_call.1} parent=1 // loop_exit
      _
    %721 = vsyncpa [#allocation4], 1
    %s722 = scalar_lea.sflag [#allocation4], 1
    %723 = vsyncpa %s722, 1
    %724 = vsyncpa [#allocation7], 1
    %725 = vsyncpa [#allocation5], 1
    %s726 = scalar_lea.sflag [#allocation5], 1
    %727 = vsyncpa %s726, 1

</llo_original>
